<compile_context>
chip_gen: v7x
topology: tpu7x:2x2x1
jax: 0.10.0
libtpu: 0.0.40
codegen_flags: <defaults>
</compile_context>

<pallas_src>
import jax
import jax.numpy as jnp
from jax.experimental import pallas as pl
from jax.experimental.pallas import tpu as pltpu


def _round_up(x: int, m: int) -> int:
    return ((x + m - 1) // m) * m


def _largest_divisor_tile(aligned: int, base: int, cap: int) -> int:
    """Largest multiple of `base` that divides `aligned` and is <= cap.

    `aligned` is a multiple of `base`, so `base` itself always qualifies.
    """
    cap = max(base, min(cap, aligned))
    t = (cap // base) * base
    while t > base:
        if aligned % t == 0:
            return t
        t -= base
    return base


def _pick_tile(dim: int, base: int, cap: int):
    """Pick (tile, padded_extent) for one axis.

    Prefer a tile that exactly divides round_up(dim, base) (zero padded-tile
    FLOPs / DMA); fall back to a full cap-sized tile only when the best
    divisor is unreasonably small.
    """
    aligned = _round_up(dim, base)
    if aligned <= cap:
        return aligned, aligned
    div = _largest_divisor_tile(aligned, base, cap)
    if div * 4 >= cap:  # "reasonable" divisor: at least cap/4
        return div, aligned
    return cap, _round_up(aligned, cap)


def _vmem_budget_bytes() -> int:
    """Generation-aware VMEM limit: ~48 MiB on 64-MiB parts (v7x), ~96 MiB on
    128-MiB parts (v5e/v6e), leaving headroom for Mosaic internal scratch."""
    cap = None
    try:
        cap = int(pltpu.get_tpu_info().vmem_capacity_bytes)
    except Exception:
        cap = None
    if not cap or cap <= 0:
        return 48 << 20  # safe on every generation, incl. v7x's 64 MiB
    return int(max(32 << 20, min(cap - (16 << 20), 96 << 20)))


def _tile_caps(op_bytes: int, budget: int):
    """Tile-size caps so 2*(tm*tk + tk*tn)*op_bytes + out buffering stays well
    under the VMEM budget on every generation while keeping the MXU busy."""
    tm_cap, tn_cap = 512, 512
    if op_bytes <= 2:
        tk_cap = 2048
    else:
        tk_cap = 2048 if budget >= (80 << 20) else 1024
    return tm_cap, tn_cap, tk_cap


# --------------------------------------------------------------------------
# Kernels
# --------------------------------------------------------------------------

def _matmul_kernel_accum_out(x_ref, w_ref, o_ref):
    """f32-output variant: the (i, j) output block is resident across the K
    grid axis, so accumulate into it directly (no VMEM scratch, no final copy)."""

    @pl.when(pl.program_id(2) == 0)
    def _init():
        o_ref[...] = jnp.zeros_like(o_ref)

    o_ref[...] += jnp.dot(
        x_ref[...], w_ref[...], preferred_element_type=jnp.float32
    )


def _matmul_kernel_scratch(x_ref, w_ref, o_ref, acc_ref):
    """Narrow-output variant: accumulate in an f32 scratch, cast at the end."""

    @pl.when(pl.program_id(2) == 0)
    def _init():
        acc_ref[...] = jnp.zeros_like(acc_ref)

    acc_ref[...] += jnp.dot(
        x_ref[...], w_ref[...], preferred_element_type=jnp.float32
    )

    @pl.when(pl.program_id(2) == pl.num_programs(2) - 1)
    def _store():
        o_ref[...] = acc_ref[...].astype(o_ref.dtype)


def _pallas_matmul(x2d, w2d, out_dtype, tm, tn, tk, vmem_limit_bytes, M, K, N):
    Mp, Kp = x2d.shape
    _, Np = w2d.shape
    grid = (Mp // tm, Np // tn, Kp // tk)

    if jnp.dtype(out_dtype) == jnp.dtype(jnp.float32):
        kernel = _matmul_kernel_accum_out
        scratch_shapes = []
    else:
        kernel = _matmul_kernel_scratch
        scratch_shapes = [pltpu.VMEM((tm, tn), jnp.float32)]

    cost = pl.CostEstimate(
        flops=2 * M * K * N,
        transcendentals=0,
        bytes_accessed=(
            Mp * Kp * x2d.dtype.itemsize * grid[1]      # x revisited per N block
            + Kp * Np * w2d.dtype.itemsize * grid[0]    # w revisited per M block
            + Mp * Np * jnp.dtype(out_dtype).itemsize
        ),
    )

    return pl.pallas_call(
        kernel,
        out_shape=jax.ShapeDtypeStruct((Mp, Np), out_dtype),
        grid_spec=pltpu.PrefetchScalarGridSpec(
            num_scalar_prefetch=0,
            grid=grid,
            in_specs=[
                pl.BlockSpec((tm, tk), lambda i, j, k: (i, k)),
                pl.BlockSpec((tk, tn), lambda i, j, k: (k, j)),
            ],
            out_specs=pl.BlockSpec((tm, tn), lambda i, j, k: (i, j)),
            scratch_shapes=scratch_shapes,
        ),
        compiler_params=pltpu.CompilerParams(
            dimension_semantics=("parallel", "parallel", "arbitrary"),
            vmem_limit_bytes=int(vmem_limit_bytes),
        ),
        cost_estimate=cost,
    )(x2d, w2d)


# --------------------------------------------------------------------------
# Layer wrapper (forward(x) = x @ mat)
# --------------------------------------------------------------------------

_TINY_FLOPS_THRESHOLD = 2 * 1024 * 1024  # below ~2 MFLOP, XLA's fused dot wins


class MatMulLayerPallas:
    """JAX/Pallas port of the PyTorch MatMulLayer: forward(x) = x @ mat.

    The weight is padded (and optionally cast to bf16) once at construction,
    keeping per-call padding off the hot path.
    """

    def __init__(self, mat, *, use_bf16: bool = False, vmem_limit_bytes=None):
        mat = jnp.asarray(mat)
        assert mat.ndim == 2, "mat must be (dim_0, dim_1)"
        self.mat = mat                                # original-precision copy
        self.K, self.N = int(mat.shape[0]), int(mat.shape[1])
        self.param_dtype = mat.dtype
        self.use_bf16 = bool(use_bf16)
        self.op_dtype = jnp.bfloat16 if self.use_bf16 else mat.dtype
        op_bytes = jnp.dtype(self.op_dtype).itemsize
        self.sub = 16 if op_bytes == 2 else 8         # sublane packing
        self.vmem_limit_bytes = (
            int(vmem_limit_bytes) if vmem_limit_bytes is not None
            else _vmem_budget_bytes()
        )
        self.tm_cap, tn_cap, tk_cap = _tile_caps(op_bytes, self.vmem_limit_bytes)

        self.tk, self.Kp = _pick_tile(self.K, 128, tk_cap)
        self.tn, self.Np = _pick_tile(self.N, 128, tn_cap)

        # Pad/cast the parameter once (exact for matmul; padding is zeros).
        w = mat.astype(self.op_dtype)
        if (self.Kp, self.Np) != (self.K, self.N):
            w = jnp.pad(w, ((0, self.Kp - self.K), (0, self.Np - self.N)))
        self.w_padded = w

    def __call__(self, x, *, force_pallas: bool = False):
        assert x.shape[-1] == self.K, "contracting dims must match"
        lead = x.shape[:-1]
        M = 1
        for d in lead:
            M *= int(d)
        out_dtype = jnp.result_type(x.dtype, self.param_dtype)

        # Tiny-problem fallback: pallas launch + pad/slice overhead dwarfs the work.
        if not force_pallas and 2 * M * self.K * self.N < _TINY_FLOPS_THRESHOLD:
            return jnp.matmul(x, self.mat).astype(out_dtype)

        x2d = x.reshape(M, self.K).astype(self.op_dtype)

        tm, Mp = _pick_tile(M, self.sub, self.tm_cap)
        tn = self.tn
        gi, gj = Mp // tm, self.Np // tn
        # Keep >= 2 parallel blocks so v7x's two TensorCores can both get work
        # (near-free extra grid steps on single-TC v5e/v6e).
        if gi * gj < 2:
            if self.Np >= 256:
                tn = _largest_divisor_tile(self.Np, 128, self.Np // 2)
            elif Mp >= 2 * self.sub:
                tm = _largest_divisor_tile(Mp, self.sub, Mp // 2)

        # Only x's K (and the sublane remainder of M) ever needs per-call padding.
        if (Mp, self.Kp) != (M, self.K):
            x2d = jnp.pad(x2d, ((0, Mp - M), (0, self.Kp - self.K)))

        out_padded = _pallas_matmul(
            x2d, self.w_padded, out_dtype, tm, tn, self.tk,
            self.vmem_limit_bytes, M, self.K, self.N,
        )
        out2d = out_padded[:M, : self.N]
        return out2d.reshape(*lead, self.N)


def matmul_layer(x, mat, **kwargs):
    """Functional convenience wrapper: x @ mat via the Pallas kernel."""
    return MatMulLayerPallas(mat, **kwargs)(x)


if __name__ == "__main__":
    key = jax.random.PRNGKey(0)
    kx, kw, kx2, kw2 = jax.random.split(key, 4)

    # --- Small shapes implied by the module: mat=(dim_0=32, dim_1=48), x=[2, 8, 32].
    # (torch initializes `mat` to zeros; random weights here so the check is
    #  non-trivial.)
    dim_0, dim_1 = 32, 48
    batch, seq = 2, 8
    x = jax.random.normal(kx, (batch, seq, dim_0), dtype=jnp.float32)
    mat = jax.random.normal(kw, (dim_0, dim_1), dtype=jnp.float32)

    layer = MatMulLayerPallas(mat)

    # Force the Pallas path at the tiny shape to validate the kernel itself.
    out = jax.block_until_ready(layer(x, force_pallas=True))
    ref = jnp.matmul(x, mat, precision=jax.lax.Precision.HIGHEST)
    assert out.shape == (batch, seq, dim_1)
    assert jnp.allclose(out, ref, rtol=1e-2, atol=1e-2), float(
        jnp.max(jnp.abs(out - ref))
    )

    # Auto path (tiny-problem fallback to jnp.matmul) must agree as well.
    out_auto = jax.block_until_ready(layer(x))
    assert jnp.allclose(out_auto, ref, rtol=1e-2, atol=1e-2)

    # --- Larger shapes: exercise divisor-aware tiling (M=320, K=768, N=384 ->
    # zero padded-tile FLOPs), single tk=768 K step accumulated into o_ref,
    # and the N split that exposes >= 2 parallel blocks for v7x's 2 TCs.
    x2 = jax.random.normal(kx2, (2, 160, 768), dtype=jnp.float32)
    mat2 = jax.random.normal(kw2, (768, 384), dtype=jnp.float32)
    layer2 = MatMulLayerPallas(mat2)
    out2 = jax.block_until_ready(layer2(x2))
    ref2 = jnp.matmul(x2, mat2, precision=jax.lax.Precision.HIGHEST)
    assert out2.shape == (2, 160, 384)
    assert jnp.allclose(out2, ref2, rtol=1e-2, atol=1e-2), float(
        jnp.max(jnp.abs(out2 - ref2))
    )

    print("KERNEL_OK")
</pallas_src>

<mosaic_0001>
module attributes {stable_mosaic.version = 11 : i64} {
  func.func @_matmul_kernel_accum_out(%arg0: i32, %arg1: i32, %arg2: i32, %arg3: memref<8x128xf32, #tpu.memory_space<vmem>>, %arg4: memref<128x128xf32, #tpu.memory_space<vmem>>, %arg5: memref<8x128xf32, #tpu.memory_space<vmem>>) attributes {dimension_semantics = [#tpu.dimension_semantics<parallel>, #tpu.dimension_semantics<parallel>, #tpu.dimension_semantics<arbitrary>], iteration_bounds = array<i64: 2, 1, 1>, scalar_prefetch = 0 : i64, scratch_operands = 0 : i64, tpu.core_type = #tpu.core_type<tc>, window_params = [{transform_indices = @transform_0, window_bounds = array<i64: 8, 128>}, {transform_indices = @transform_1, window_bounds = array<i64: 128, 128>}, {transform_indices = @transform_2, window_bounds = array<i64: 8, 128>}]} {
    %c0_i32 = arith.constant 0 : i32
    %0 = arith.cmpi eq, %arg2, %c0_i32 : i32
    %1 = arith.extui %0 : i1 to i32
    %c0_i32_0 = arith.constant 0 : i32
    %2 = arith.cmpi ne, %1, %c0_i32_0 : i32
    scf.if %2 {
      %cst_8 = arith.constant 0.000000e+00 : f32
      %9 = vector.broadcast %cst_8 : f32 to vector<8x128xf32>
      %c0_9 = arith.constant 0 : index
      %c0_10 = arith.constant 0 : index
      %10 = vector.load %arg5[%c0_9, %c0_10] : memref<8x128xf32, #tpu.memory_space<vmem>>, vector<8x128xf32>
      tpu.vector_store %arg5[%c0_9, %c0_10], %9 {strides = array<i32>} : memref<8x128xf32, #tpu.memory_space<vmem>>, vector<8x128xf32>,
    } else {
    }
    %c0 = arith.constant 0 : index
    %c0_1 = arith.constant 0 : index
    %3 = vector.load %arg5[%c0, %c0_1] : memref<8x128xf32, #tpu.memory_space<vmem>>, vector<8x128xf32>
    %c0_2 = arith.constant 0 : index
    %c0_3 = arith.constant 0 : index
    %4 = vector.load %arg3[%c0_2, %c0_3] : memref<8x128xf32, #tpu.memory_space<vmem>>, vector<8x128xf32>
    %c0_4 = arith.constant 0 : index
    %c0_5 = arith.constant 0 : index
    %5 = vector.load %arg4[%c0_4, %c0_5] : memref<128x128xf32, #tpu.memory_space<vmem>>, vector<128x128xf32>
    %cst = arith.constant dense<0.000000e+00> : vector<8x128xf32>
    %6 = tpu.matmul %4, %5, %cst {dimension_numbers = #tpu.dot_dimension_numbers<[1], [0], [0], [1], [0, 0, 1, 1], [], []>} : vector<8x128xf32>, vector<128x128xf32>, vector<8x128xf32> -> vector<8x128xf32>
    %7 = arith.addf %3, %6 : vector<8x128xf32>
    %c0_6 = arith.constant 0 : index
    %c0_7 = arith.constant 0 : index
    %8 = vector.load %arg5[%c0_6, %c0_7] : memref<8x128xf32, #tpu.memory_space<vmem>>, vector<8x128xf32>
    tpu.vector_store %arg5[%c0_6, %c0_7], %7 {strides = array<i32>} : memref<8x128xf32, #tpu.memory_space<vmem>>, vector<8x128xf32>,
    return
  }
  func.func @transform_0(%arg0: i32, %arg1: i32, %arg2: i32) -> (i32, i32) {
    %c0_i32 = arith.constant 0 : i32
    return %arg0, %arg2 : i32, i32
  }
  func.func @transform_1(%arg0: i32, %arg1: i32, %arg2: i32) -> (i32, i32) {
    %c0_i32 = arith.constant 0 : i32
    return %arg2, %arg1 : i32, i32
  }
  func.func @transform_2(%arg0: i32, %arg1: i32, %arg2: i32) -> (i32, i32) {
    %c0_i32 = arith.constant 0 : i32
    return %arg0, %arg1 : i32, i32
  }
}

</mosaic_0001>

<llo_original>
// kernel: tpu_custom_call.1
$region0: #{tpu_custom_call.1}
  #allocation0 [shape = 'u32[]', space=smem, size = 0x4, offset = 0x4, fixed_abs, tag = 'smem constant byte address 0x4 - core index']
  #allocation1 [shape = 'u32[144,128]{1,0:T(1,128)}', space=vmem, size = 0x12000, scoped, tag = 'internal scratch']
  %s0 = inlined_call_operand.hbm [shape: f32[16,128], index: 0, kind: input, shape index: {}]
  %s1 = inlined_call_operand.hbm [shape: f32[128,128], index: 1, kind: input, shape index: {}]
  %s2 = inlined_call_operand.hbm [shape: f32[16,128], index: 2, kind: output, shape index: {}]
  %s3 = sld [smem:[#allocation0]]
  $region53: #{tpu_custom_call.1} parent=0
    _
  %s5 = ssub.s32 1, %s3
  %s6 = scalar_select 0, %s5, %s3
  $region1: #{tpu_custom_call.1} parent=0
    #allocation2 [shape = 'u8[8192]{0}', space=vmem, size = 0x2000, scoped, tag = 'input window, operand 0']
    #allocation3 [shape = 's32[2]{0}', space=sflag, size = 0x8, scoped, tag = 'scoped memory for tpu_custom_call.1']
    #allocation4 [shape = 's32[2]{0}', space=sflag, size = 0x8, scoped, tag = 'scoped memory for tpu_custom_call.1']
    #allocation5 [shape = 'u8[65536]{0}', space=vmem, size = 0x10000, scoped, tag = 'input window, operand 1, single buffered']
    #allocation6 [shape = 's32[1]{0}', space=sflag, size = 0x4, scoped, tag = 'scoped memory for tpu_custom_call.1']
    #allocation7 [shape = 'u8[8192]{0}', space=vmem, size = 0x2000, scoped, tag = 'output window, operand 0']
    %7 = vsyncpa [#allocation3], 0
    %s8 = scalar_lea.sflag [#allocation3], 1
    %9 = vsyncpa %s8, 0
    %10 = vsyncpa [#allocation6], 0
    %11 = vsyncpa [#allocation4], 0
    %s12 = scalar_lea.sflag [#allocation4], 1
    %13 = vsyncpa %s12, 0
    loop: start=0, step=1, limit=4
    $region2: #{tpu_custom_call.1} parent=1 // loop_pre_header
      _
    $region3: #{tpu_custom_call.1} parent=1 // loop_header
      %s15 = sphi 0, %s19
      %p16 = scmp.ge.s32.totalorder %s15, 4
      %s22 = sphi 0, %s41
      %s23 = sphi 0, %s37
      %s24 = sphi 0, %s33
      %s25 = sphi 0, %s22
      %s26 = sphi 0, %s23
      %s27 = sphi 0, %s24
      %s28 = sphi 0, %s25
      %s29 = sphi 0, %s26
      %s30 = sphi 0, %s27
      %s46 = sphi 0, %s48
      %s49 = sphi 0, %s46
      %s50 = sphi 0, %s49
      %s66 = sphi 0, %s50
      %s74 = sphi 0, %s76
      %s77 = sphi 0, %s74
      %s78 = sphi 0, %s77
      %s94 = sphi 0, %s78
      %s102 = sphi 0, %s104
      %s105 = sphi 0, %s102
      %s106 = sphi 0, %s105
      %s122 = sphi 0, %s106
    $region4: #{tpu_custom_call.1} parent=1 // loop_header_branch
      %18 = sbr.rel (%p16) target = $region8
    $region5: #{tpu_custom_call.1} parent=1 // loop_body
      %s20 = ssub.s32 %s15, 1
      %s21 = ssub.s32 %s15, 2
      %s31 = sadd.s32 1, %s24
      %p32 = scmp.ge.s32.totalorder %s31, 1
      %s33 = scalar_select %p32, 0, %s31
      %s34 = sadd.s32 1, %s23
      %s35 = scalar_select %p32, %s34, %s23
      %p36 = scmp.ge.s32.totalorder %s35, 1
      %s37 = scalar_select %p36, 0, %s35
      %s38 = sadd.s32 1, %s22
      %s39 = scalar_select %p36, %s38, %s22
      %p40 = scmp.ge.s32.totalorder %s39, 2
      %s41 = scalar_select %p40, 0, %s39
      %s42 = ssub.s32 %s22, %s41
      %s43 = ssub.s32 %s24, %s33
      %s44 = sor.u32 %s42, %s43
      %p45 = scmp.eq.s32.totalorder %s44, 0
      %s47 = sadd.s32 %s46, 1
      %s48 = scalar_select %p45, %s46, %s47
      %p51 = pneg %p45
      %p52 = scmp.eq.s32.totalorder %s15, 1
      %p53 = por %p51, %p52
      %p54 = scmp.ne.s32.totalorder %s46, %s49
      %p55 = scmp.eq.s32.totalorder %s15, 0
      %p56 = por %p54, %p55
      %p57 = scmp.ne.s32.totalorder %s46, %s49
      %p58 = scmp.eq.s32.totalorder %s20, 1
      %p59 = por %p57, %p58
      %p60 = scmp.ne.s32.totalorder %s49, %s50
      %p61 = scmp.eq.s32.totalorder %s20, 0
      %p62 = por %p60, %p61
      %p63 = scmp.ne.s32.totalorder %s49, %s50
      %p64 = scmp.eq.s32.totalorder %s21, 1
      %p65 = por %p63, %p64
      %p67 = scmp.ne.s32.totalorder %s50, %s66
      %p68 = scmp.eq.s32.totalorder %s21, 0
      %p69 = por %p67, %p68
      %s70 = ssub.s32 %s24, %s33
      %s71 = ssub.s32 %s23, %s37
      %s72 = sor.u32 %s70, %s71
      %p73 = scmp.eq.s32.totalorder %s72, 0
      %s75 = sadd.s32 %s74, 1
      %s76 = scalar_select %p73, %s74, %s75
      %p79 = pneg %p73
      %p80 = scmp.eq.s32.totalorder %s15, 1
      %p81 = por %p79, %p80
      %p82 = scmp.ne.s32.totalorder %s74, %s77
      %p83 = scmp.eq.s32.totalorder %s15, 0
      %p84 = por %p82, %p83
      %p85 = scmp.ne.s32.totalorder %s74, %s77
      %p86 = scmp.eq.s32.totalorder %s20, 1
      %p87 = por %p85, %p86
      %p88 = scmp.ne.s32.totalorder %s77, %s78
      %p89 = scmp.eq.s32.totalorder %s20, 0
      %p90 = por %p88, %p89
      %p91 = scmp.ne.s32.totalorder %s77, %s78
      %p92 = scmp.eq.s32.totalorder %s21, 1
      %p93 = por %p91, %p92
      %p95 = scmp.ne.s32.totalorder %s78, %s94
      %p96 = scmp.eq.s32.totalorder %s21, 0
      %p97 = por %p95, %p96
      %s98 = ssub.s32 %s22, %s41
      %s99 = ssub.s32 %s23, %s37
      %s100 = sor.u32 %s98, %s99
      %p101 = scmp.eq.s32.totalorder %s100, 0
      %s103 = sadd.s32 %s102, 1
      %s104 = scalar_select %p101, %s102, %s103
      %p107 = pneg %p101
      %p108 = scmp.eq.s32.totalorder %s15, 1
      %p109 = por %p107, %p108
      %p110 = scmp.ne.s32.totalorder %s102, %s105
      %p111 = scmp.eq.s32.totalorder %s15, 0
      %p112 = por %p110, %p111
      %p113 = scmp.ne.s32.totalorder %s102, %s105
      %p114 = scmp.eq.s32.totalorder %s20, 1
      %p115 = por %p113, %p114
      %p116 = scmp.ne.s32.totalorder %s105, %s106
      %p117 = scmp.eq.s32.totalorder %s20, 0
      %p118 = por %p116, %p117
      %p119 = scmp.ne.s32.totalorder %s105, %s106
      %p120 = scmp.eq.s32.totalorder %s21, 1
      %p121 = por %p119, %p120
      %p123 = scmp.ne.s32.totalorder %s106, %s122
      %p124 = scmp.eq.s32.totalorder %s21, 0
      %p125 = por %p123, %p124
      %p126 = scmp.le.s32.totalorder 1, %s15
      %p127 = scmp.lt.s32.totalorder %s15, 3
      %p128 = pnand %p126, %p127
      %p129 = pneg %p128
      // Predicated region
      $region9: #{tpu_custom_call.1} parent=5 // pred_check
        _
      $region10: #{tpu_custom_call.1} parent=5 // pred_check_branch
        %131 = sbr.rel (%p128) target = $region12
      $region11: #{tpu_custom_call.1} parent=5 // pred_region
        %s132 = ssub.s32 %s15, 1
        // Predicated region
        $region13: #{tpu_custom_call.1} parent=11 // pred_check
          %p133 = pneg %p90
        $region14: #{tpu_custom_call.1} parent=11 // pred_check_branch
          %135 = sbr.rel (%p133) target = $region16
        $region15: #{tpu_custom_call.1} parent=11 // pred_region
          %s136 = smul.u32 16, %s27
          %s138 = ssub.s32 2048, 2048
          %139 = vsyncadd [#allocation6], %s138
          %s140 = sadd.s32 %s26, %s136
          %s141 = smul.addr %s140, 128
          %s142 = scalar_lea.hbm %s1, %s141
          %s143 = sshll.u32 [#allocation5], 4
          %s144 = int_to_ptr.vmem [resolvable:$true] %s143
          %149 = dma.hbm_to_vmem [thread:$0]  %s142, 2048, %s144, [#allocation6], 128, 128, 8
        $region16: #{tpu_custom_call.1} parent=11 // pred_fallthru
          _
      $region12: #{tpu_custom_call.1} parent=5 // pred_fallthru
        _
      %p150 = scmp.lt.s32.totalorder %s15, 2
      // Predicated region
      $region17: #{tpu_custom_call.1} parent=5 // pred_check
        %p151 = pneg %p150
      $region18: #{tpu_custom_call.1} parent=5 // pred_check_branch
        %153 = sbr.rel (%p151) target = $region20
      $region19: #{tpu_custom_call.1} parent=5 // pred_region
        // Predicated region
        $region21: #{tpu_custom_call.1} parent=19 // pred_check
          %p154 = pneg %p56
        $region22: #{tpu_custom_call.1} parent=19 // pred_check_branch
          %156 = sbr.rel (%p154) target = $region24
        $region23: #{tpu_custom_call.1} parent=19 // pred_region
          %s157 = sand.u32 %s46, 1
          %s158 = scalar_lea.sflag [#allocation3], %s157
          %s159 = sand.u32 %s46, 1
          %s160 = smul.addr %s159, 8
          %s161 = scalar_lea.vmem [#allocation2], %s160
          %s163 = ssub.s32 128, 128
          %164 = vsyncadd %s158, %s163
          %s165 = sadd.s32 %s24, %s22
          %s166 = smul.addr %s165, 128
          %s167 = scalar_lea.hbm %s0, %s166
          %s169 = sshll.u32 %s161, 4
          %s170 = int_to_ptr.vmem [resolvable:$true] %s169
          %172 = dma.hbm_to_vmem [thread:$0]  %s167, 128, %s170, %s158
        $region24: #{tpu_custom_call.1} parent=19 // pred_fallthru
          _
      $region20: #{tpu_custom_call.1} parent=5 // pred_fallthru
        _
      %p173 = scmp.le.s32.totalorder 1, %s15
      %p174 = scmp.lt.s32.totalorder %s15, 3
      %p175 = pnand %p173, %p174
      %p176 = pneg %p175
      // Predicated region
      $region25: #{tpu_custom_call.1} parent=5 // pred_check
        _
      $region26: #{tpu_custom_call.1} parent=5 // pred_check_branch
        %178 = sbr.rel (%p175) target = $region28
      $region27: #{tpu_custom_call.1} parent=5 // pred_region
        %s179 = ssub.s32 %s15, 1
        %s180 = sand.u32 %s49, 1
        %s181 = scalar_lea.sflag [#allocation3], %s180
        %s182 = sand.u32 %s49, 1
        %s183 = smul.addr %s182, 8
        %s184 = scalar_lea.vmem [#allocation2], %s183
        // Predicated region
        $region29: #{tpu_custom_call.1} parent=27 // pred_check
          %p185 = pneg %p62
        $region30: #{tpu_custom_call.1} parent=27 // pred_check_branch
          %187 = sbr.rel (%p185) target = $region32
        $region31: #{tpu_custom_call.1} parent=27 // pred_region
          %188 = dma.done %s181, 128
        $region32: #{tpu_custom_call.1} parent=27 // pred_fallthru
          _
        // Predicated region
        $region33: #{tpu_custom_call.1} parent=27 // pred_check
          %p189 = pneg %p90
        $region34: #{tpu_custom_call.1} parent=27 // pred_check_branch
          %191 = sbr.rel (%p189) target = $region36
        $region35: #{tpu_custom_call.1} parent=27 // pred_region
          %192 = dma.done [#allocation6], 2048
        $region36: #{tpu_custom_call.1} parent=27 // pred_fallthru
          _
        %s193 = sand.u32 %s49, 1
        %s194 = scalar_lea.sflag [#allocation3], %s193
        %s195 = sand.u32 %s49, 1
        %s196 = smul.addr %s195, 8
        %s197 = scalar_lea.vmem [#allocation2], %s196
        %p198 = pneg %p62
        %p199 = pneg %p59
        %p200 = pneg %p90
        %p201 = pneg %p87
        %p202 = pneg %p118
        %p203 = pneg %p115
        %s204 = sand.u32 %s105, 1
        %s205 = scalar_lea.sflag [#allocation4], %s204
        %s206 = sand.u32 %s105, 1
        %s207 = smul.addr %s206, 8
        %s208 = scalar_lea.vmem [#allocation7], %s207
        %s209 = smul.u32 16, %s27
        %p210 = scmp.eq.s32.totalorder %s27, 0
        // Predicated region
        $region37: #{tpu_custom_call.1} parent=27 // pred_check
          %p211 = pneg %p210
        $region38: #{tpu_custom_call.1} parent=27 // pred_check_branch
          %213 = sbr.rel (%p211) target = $region40
        $region39: #{tpu_custom_call.1} parent=27 // pred_region
          %214 = vst [vmem:[%s208] sm:$0xff] 0.0
        $region40: #{tpu_custom_call.1} parent=27 // pred_fallthru
          _
        %v215 = vld [vmem:[%s208] sm:$0xff]
        %v216 = vld [vmem:[%s184] sm:$0xff]
        %v217 = vld [vmem:[#allocation5] sm:$0xff]
        %v218 = vld [vmem:[#allocation5 + $0x8] sm:$0xff]
        %v219 = vld [vmem:[#allocation5 + $0x10] sm:$0xff]
        %v220 = vld [vmem:[#allocation5 + $0x18] sm:$0xff]
        %v221 = vld [vmem:[#allocation5 + $0x20] sm:$0xff]
        %v222 = vld [vmem:[#allocation5 + $0x28] sm:$0xff]
        %v223 = vld [vmem:[#allocation5 + $0x30] sm:$0xff]
        %v224 = vld [vmem:[#allocation5 + $0x38] sm:$0xff]
        %v225 = vld [vmem:[#allocation5 + $0x40] sm:$0xff]
        %v226 = vld [vmem:[#allocation5 + $0x48] sm:$0xff]
        %v227 = vld [vmem:[#allocation5 + $0x50] sm:$0xff]
        %v228 = vld [vmem:[#allocation5 + $0x58] sm:$0xff]
        %v229 = vld [vmem:[#allocation5 + $0x60] sm:$0xff]
        %v230 = vld [vmem:[#allocation5 + $0x68] sm:$0xff]
        %v231 = vld [vmem:[#allocation5 + $0x70] sm:$0xff]
        %v232 = vld [vmem:[#allocation5 + $0x78] sm:$0xff]
        %233 = vmatprep.subr.mxu0 0.0
        %234 = vmatpush1.msra.mxu0 %v217
        %235 = vmatprep.subr.mxu0 0.0
        %236 = vmatpush1.msra.mxu0 %v218
        %237 = vmatprep.subr.mxu0 0.0
        %238 = vmatpush1.msra.mxu0 %v219
        %239 = vmatprep.subr.mxu0 0.0
        %240 = vmatpush1.msra.mxu0 %v220
        %241 = vmatprep.subr.mxu0 0.0
        %242 = vmatpush1.msra.mxu0 %v221
        %243 = vmatprep.subr.mxu0 0.0
        %244 = vmatpush1.msra.mxu0 %v222
        %245 = vmatprep.subr.mxu0 0.0
        %246 = vmatpush1.msra.mxu0 %v223
        %247 = vmatprep.subr.mxu0 0.0
        %248 = vmatpush1.msra.mxu0 %v224
        %249 = vmatprep.subr.mxu0 0.0
        %250 = vmatpush1.msra.mxu0 %v225
        %251 = vmatprep.subr.mxu0 0.0
        %252 = vmatpush1.msra.mxu0 %v226
        %253 = vmatprep.subr.mxu0 0.0
        %254 = vmatpush1.msra.mxu0 %v227
        %255 = vmatprep.subr.mxu0 0.0
        %256 = vmatpush1.msra.mxu0 %v228
        %257 = vmatprep.subr.mxu0 0.0
        %258 = vmatpush1.msra.mxu0 %v229
        %259 = vmatprep.subr.mxu0 0.0
        %260 = vmatpush1.msra.mxu0 %v230
        %261 = vmatprep.subr.mxu0 0.0
        %262 = vmatpush1.msra.mxu0 %v231
        %263 = vmatprep.subr.mxu0 0.0
        %264 = vmatpush1.msra.mxu0 %v232
        %265 = vmatprep.subr.mxu0 0.0
        %266 = vmatpush1.msra.mxu0 0.0
        %267 = vmatprep.subr.mxu0 0.0
        %268 = vmatpush1.msra.mxu0 0.0
        %269 = vmatprep.subr.mxu0 0.0
        %270 = vmatpush1.msra.mxu0 0.0
        %271 = vmatprep.subr.mxu0 0.0
        %272 = vmatpush1.msra.mxu0 0.0
        %273 = vmatprep.subr.mxu0 0.0
        %274 = vmatpush1.msra.mxu0 0.0
        %275 = vmatprep.subr.mxu0 0.0
        %276 = vmatpush1.msra.mxu0 0.0
        %277 = vmatprep.subr.mxu0 0.0
        %278 = vmatpush1.msra.mxu0 0.0
        %279 = vmatprep.subr.mxu0 0.0
        %280 = vmatpush1.msra.mxu0 0.0
        %281 = vmatprep.subr.mxu0 0.0
        %282 = vmatpush1.msra.mxu0 0.0
        %283 = vmatprep.subr.mxu0 0.0
        %284 = vmatpush1.msra.mxu0 0.0
        %285 = vmatprep.subr.mxu0 0.0
        %286 = vmatpush1.msra.mxu0 0.0
        %287 = vmatprep.subr.mxu0 0.0
        %288 = vmatpush1.msra.mxu0 0.0
        %289 = vmatprep.subr.mxu0 0.0
        %290 = vmatpush1.msra.mxu0 0.0
        %291 = vmatprep.subr.mxu0 0.0
        %292 = vmatpush1.msra.mxu0 0.0
        %293 = vmatprep.subr.mxu0 0.0
        %294 = vmatpush1.msra.mxu0 0.0
        %295 = vmatprep.subr.mxu0 0.0
        %296 = vmatpush1.msra.mxu0 0.0
        %297 = vmatprep.mubr.f32.mxu0 0.0
        %298 = vmatmul.mubr.f32.gmra.mrb[0].mxu0 %v216
        %v299 = vpop.f32.mrb[0].mxu0
        %v300 = vadd.f32 0.0, %v299
        %v301 = vpop.f32.mrb[0].mxu0
        %302 = vdwg.mxu0
        %v303 = vadd.f32 %v215, %v300
        %304 = vst [vmem:[%s208] sm:$0xff] %v303
        %s305 = sand.u32 %s105, 1
        %s306 = scalar_lea.sflag [#allocation4], %s305
        %s307 = sand.u32 %s105, 1
        %s308 = smul.addr %s307, 8
        %s309 = scalar_lea.vmem [#allocation7], %s308
        // Predicated region
        $region41: #{tpu_custom_call.1} parent=27 // pred_check
          %p310 = pneg %p115
        $region42: #{tpu_custom_call.1} parent=27 // pred_check_branch
          %312 = sbr.rel (%p310) target = $region44
        $region43: #{tpu_custom_call.1} parent=27 // pred_region
          %s314 = ssub.s32 128, 128
          %315 = vsyncadd %s306, %s314
          %s316 = sadd.s32 %s26, %s25
          %s317 = smul.addr %s316, 128
          %s318 = scalar_lea.hbm %s2, %s317
          %s320 = sshll.u32 %s309, 4
          %s321 = int_to_ptr.vmem [resolvable:$true] %s320
          %323 = dma.vmem_to_hbm [thread:$0]  %s321, 128, %s318, %s306
        $region44: #{tpu_custom_call.1} parent=27 // pred_fallthru
          _
      $region28: #{tpu_custom_call.1} parent=5 // pred_fallthru
        _
      %p324 = scmp.le.s32.totalorder 2, %s15
      // Predicated region
      $region45: #{tpu_custom_call.1} parent=5 // pred_check
        %p325 = pneg %p324
      $region46: #{tpu_custom_call.1} parent=5 // pred_check_branch
        %327 = sbr.rel (%p325) target = $region48
      $region47: #{tpu_custom_call.1} parent=5 // pred_region
        %s328 = ssub.s32 %s15, 2
        // Predicated region
        $region49: #{tpu_custom_call.1} parent=47 // pred_check
          %p329 = pneg %p121
        $region50: #{tpu_custom_call.1} parent=47 // pred_check_branch
          %331 = sbr.rel (%p329) target = $region52
        $region51: #{tpu_custom_call.1} parent=47 // pred_region
          %s332 = sand.u32 %s106, 1
          %s333 = scalar_lea.sflag [#allocation4], %s332
          %s334 = sand.u32 %s106, 1
          %s335 = smul.addr %s334, 8
          %s336 = scalar_lea.vmem [#allocation7], %s335
          %337 = dma.done %s333, 128
        $region52: #{tpu_custom_call.1} parent=47 // pred_fallthru
          _
      $region48: #{tpu_custom_call.1} parent=5 // pred_fallthru
        _
    $region6: #{tpu_custom_call.1} parent=1 // loop_footer
      %s19 = sadd.s32 1, %s15
    $region7: #{tpu_custom_call.1} parent=1 // loop_footer_branch
      %14 = sbr.rel target = $region3
    $region8: #{tpu_custom_call.1} parent=1 // loop_exit
      _
    %338 = vsyncpa [#allocation3], 1
    %s339 = scalar_lea.sflag [#allocation3], 1
    %340 = vsyncpa %s339, 1
    %341 = vsyncpa [#allocation6], 1
    %342 = vsyncpa [#allocation4], 1
    %s343 = scalar_lea.sflag [#allocation4], 1
    %344 = vsyncpa %s343, 1

</llo_original>
